<compile_context>
chip_gen: v5e
topology: v5e:2x2
jax: 0.10.0
libtpu: 0.0.40
codegen_flags: <defaults>
</compile_context>

<pallas_src>
import jax
import jax.numpy as jnp
import numpy as np
from jax.experimental import pallas as pl
from jax.experimental.pallas import tpu as pltpu


def _round_up(a, m):
    return ((a + m - 1) // m) * m


def _gated_agg_kernel(x_ref, keep_ref, w1_ref, b1_ref, wg2_ref, bg2_ref,
                      wn2_ref, bn2_ref, out_ref):
    # x_ref:    (S, TB, D)   native (seq, batch, feat) layout
    # keep_ref: (S, TB, 1)   f32: 1.0 = keep, 0.0 = masked
    # w1_ref:   (D, 2*Dp)    fused [wg1 | wn1], zero-padded to lane tiles
    # b1_ref:   (1, 2*Dp)
    # wg2_ref:  (1, Dp)      gate second layer as a row vector (VPU reduce)
    # bg2_ref:  (1, 1)
    # wn2_ref:  (Dp, D)
    # bn2_ref:  (1, D)
    # out_ref:  (TB, D)
    S, TB, D = x_ref.shape
    Dp = wn2_ref.shape[0]
    M = S * TB

    # s-major flatten; layout-preserving because TB % 8 == 0.
    x = x_ref[...].reshape(M, D).astype(w1_ref.dtype)        # MXU-dtype cast in-kernel

    # Fused first layers of gate_fn and node_fn: one wide MXU matmul.
    h = jnp.dot(x, w1_ref[...], preferred_element_type=jnp.float32) + b1_ref[...]
    h = jnp.maximum(h, 0.0)                                   # (M, 2*Dp) f32
    h1 = h[:, :Dp]                                            # gate branch hidden
    h2 = h[:, Dp:]                                            # node branch hidden

    # gate second layer ((Dp, 1) matmul) as VPU multiply + lane reduce.
    gate = jnp.sum(h1 * wg2_ref[...], axis=-1, keepdims=True) + bg2_ref[...]

    # Exact masking: sigmoid(-inf) == 0 == sigmoid(gate) * keep.
    m = jax.nn.sigmoid(gate) * keep_ref[...].reshape(M, 1)    # (M, 1) f32

    # node second layer: real (Dp, D) MXU matmul.
    v = jnp.dot(h2.astype(wn2_ref.dtype), wn2_ref[...],
                preferred_element_type=jnp.float32) + bn2_ref[...]   # (M, D) f32

    # Final bmm(m^T, v): elementwise weighting + reduction over the seq axis.
    out_ref[...] = jnp.sum((m * v).reshape(S, TB, D), axis=0)        # (TB, D)


def gated_aggregation(x, mask, params, *, target_rows=1024,
                      matmul_dtype=jnp.bfloat16, vmem_limit_bytes=None):
    """x: (S, B, D), mask: (B, S) bool (True => masked)  ->  (B, D) float32.

    matmul_dtype controls only the MXU operands (default bf16 on all gens);
    accumulation and all elementwise math stay f32.
    """
    # TODO(synk): optional fp8 weight/x path for the v7x MXU (needs accuracy gating).
    x = jnp.asarray(x)
    S, B, D = x.shape
    Dp = _round_up(D, 128)                         # lane-tile aligned hidden width
    f32 = jnp.float32
    mx_isz = jnp.dtype(matmul_dtype).itemsize
    x_isz = jnp.dtype(x.dtype).itemsize

    (wg1, bg1, wg2, bg2, wn1, bn1, wn2, bn2) = params
    # Fused, lane-padded first-layer weights/biases: cols [0:D] = gate branch,
    # [Dp:Dp+D] = node branch, rest zero (contributes exactly 0 downstream).
    w1 = jnp.zeros((D, 2 * Dp), f32)
    w1 = w1.at[:, :D].set(wg1).at[:, Dp:Dp + D].set(wn1).astype(matmul_dtype)
    b1 = jnp.zeros((1, 2 * Dp), f32)
    b1 = b1.at[0, :D].set(bg1).at[0, Dp:Dp + D].set(bn1)
    wg2r = jnp.zeros((1, Dp), f32).at[0, :D].set(jnp.reshape(wg2, (-1,)))
    bg2r = jnp.reshape(bg2, (1, 1)).astype(f32)
    wn2p = jnp.zeros((Dp, D), f32).at[:D, :].set(wn2).astype(matmul_dtype)
    bn2r = jnp.reshape(bn2, (1, D)).astype(f32)

    # ---- VMEM budget -> samples per grid step (TB) ----
    if vmem_limit_bytes is None:
        try:
            vmem_limit_bytes = int(pltpu.get_tpu_info().vmem_capacity_bytes * 0.75)
        except Exception:
            vmem_limit_bytes = 48 << 20            # safe on v5e/v6e/v7x
    weight_bytes = 2 * ((D * 2 * Dp + Dp * D) * mx_isz       # x2 double-buffered consts
                        + (2 * Dp + Dp + 1 + D) * 4)
    bytes_per_sample = S * (
        2 * x_isz * D          # x tile, double-buffered input
        + mx_isz * D           # in-kernel MXU-dtype copy of x
        + 4 * 2 * Dp           # h (f32)
        + 4 * 2 * Dp           # h1*wg2 temp / h2 cast copy
        + 4 * 2 * D            # v, m*v (f32)
        + 4 * 128 * 4          # lane-padded (.,1) columns: keep(x2 buf), gate, m
    )
    avail = max(vmem_limit_bytes - weight_bytes - (2 << 20), bytes_per_sample)
    tb_cap = max(8, int(avail // bytes_per_sample))

    B8 = _round_up(B, 8)
    min_tb = pl.cdiv(target_rows, S)               # fill the MXU M dimension
    TB = min(tb_cap, B8)
    TB = max(TB, min(min_tb, B8))
    if B8 > 8:                                     # keep >= 2 grid steps for v7x's 2 TCs
        TB = min(TB, _round_up(pl.cdiv(B8, 2), 8))
    TB = max(8, (TB // 8) * 8)                     # (8,128) block-shape rule
    nb = pl.cdiv(B, TB)
    B_pad = nb * TB

    # Keep-mask in the same s-major order as x; padded samples get keep = 0.
    keep = jnp.transpose(1.0 - mask.astype(f32))             # (S, B)
    if B_pad != B:
        # NOTE: this pad is an extra copy of x; callers should prefer B % TB == 0.
        x = jnp.pad(x, ((0, 0), (0, B_pad - B), (0, 0)))
        keep = jnp.pad(keep, ((0, 0), (0, B_pad - B)))
    keep = keep.reshape(S, B_pad, 1)
    # NOTE: keep is a narrow column DMA; its HBM bytes are ~D x smaller than x
    # and its lane-padded VMEM residency is charged in bytes_per_sample above.

    def const(shape):
        return pl.BlockSpec(shape, lambda b: (0,) * len(shape))

    out = pl.pallas_call(
        _gated_agg_kernel,
        out_shape=jax.ShapeDtypeStruct((B_pad, D), f32),
        grid_spec=pltpu.PrefetchScalarGridSpec(
            num_scalar_prefetch=0,
            grid=(nb,),
            in_specs=[
                pl.BlockSpec((S, TB, D), lambda b: (0, b, 0)),    # x, native layout
                pl.BlockSpec((S, TB, 1), lambda b: (0, b, 0)),    # keep
                const((D, 2 * Dp)),                               # w1 (fused)
                const((1, 2 * Dp)),                               # b1 (fused)
                const((1, Dp)),                                   # wg2 row
                const((1, 1)),                                    # bg2
                const((Dp, D)),                                   # wn2
                const((1, D)),                                    # bn2
            ],
            out_specs=pl.BlockSpec((TB, D), lambda b: (b, 0)),    # lane-dense output
        ),
        compiler_params=pltpu.CompilerParams(
            dimension_semantics=("parallel",),
            vmem_limit_bytes=int(vmem_limit_bytes)),
    )(x, keep, w1, b1, wg2r, bg2r, wn2p, bn2r)

    return out[:B]


def init_params(key, feat_dim):
    """Deterministic init mimicking nn.Linear default (U(-1/sqrt(fan_in), ..))."""
    D = feat_dim
    ks = jax.random.split(key, 8)
    u = lambda k, shape, fan_in: jax.random.uniform(
        k, shape, jnp.float32, -1.0 / np.sqrt(fan_in), 1.0 / np.sqrt(fan_in))
    wg1 = u(ks[0], (D, D), D)   # stored as (in, out): y = x @ W + b
    bg1 = u(ks[1], (D,), D)
    wg2 = u(ks[2], (D, 1), D)
    bg2 = u(ks[3], (1,), D)
    wn1 = u(ks[4], (D, D), D)
    bn1 = u(ks[5], (D,), D)
    wn2 = u(ks[6], (D, D), D)
    bn2 = u(ks[7], (D,), D)
    return (wg1, bg1, wg2, bg2, wn1, bn1, wn2, bn2)


def reference(x, mask, params):
    """Pure-JAX reference matching the PyTorch forward."""
    (wg1, bg1, wg2, bg2, wn1, bn1, wn2, bn2) = params
    out = jnp.transpose(x, (1, 0, 2))                                   # (B,S,D)
    h1 = jnp.maximum(out @ wg1 + bg1, 0.0)
    gate = h1 @ wg2 + bg2                                               # (B,S,1)
    gate = jnp.where(mask[:, :, None], -jnp.inf, gate)
    m = jax.nn.sigmoid(gate)
    h2 = jnp.maximum(out @ wn1 + bn1, 0.0)
    v = h2 @ wn2 + bn2                                                  # (B,S,D)
    return jnp.squeeze(jnp.einsum("bso,bsd->bod", m, v), axis=1)        # (B,D)


if __name__ == "__main__":
    B, S, D = 2, 8, 32
    key = jax.random.PRNGKey(0)
    kx, km, kp = jax.random.split(key, 3)

    x = jax.random.normal(kx, (S, B, D), jnp.float32)                   # (seq, batch, feat)
    mask = jax.random.bernoulli(km, 0.3, (B, S))                        # True => masked
    params = init_params(kp, D)

    ref = reference(x, mask, params)

    # f32 MXU path: bit-faithful to the reference math (tight tolerance).
    out_f32 = jax.block_until_ready(
        gated_aggregation(x, mask, params, matmul_dtype=jnp.float32))
    np.testing.assert_allclose(np.asarray(out_f32), np.asarray(ref),
                               rtol=1e-5, atol=1e-5)

    # Default bf16 MXU path (accumulation stays f32): relaxed tolerance.
    out_bf16 = jax.block_until_ready(gated_aggregation(x, mask, params))
    np.testing.assert_allclose(np.asarray(out_bf16), np.asarray(ref),
                               rtol=5e-2, atol=5e-2)

    print("KERNEL_OK")
</pallas_src>

<mosaic_0001>
module attributes {stable_mosaic.version = 11 : i64} {
  func.func @_gated_agg_kernel(%arg0: i32, %arg1: memref<8x8x32xf32, #tpu.memory_space<vmem>>, %arg2: memref<8x8x1xf32, #tpu.memory_space<vmem>>, %arg3: memref<32x256xf32, #tpu.memory_space<vmem>>, %arg4: memref<1x256xf32, #tpu.memory_space<vmem>>, %arg5: memref<1x128xf32, #tpu.memory_space<vmem>>, %arg6: memref<1x1xf32, #tpu.memory_space<vmem>>, %arg7: memref<128x32xf32, #tpu.memory_space<vmem>>, %arg8: memref<1x32xf32, #tpu.memory_space<vmem>>, %arg9: memref<8x32xf32, #tpu.memory_space<vmem>>) attributes {dimension_semantics = [#tpu.dimension_semantics<parallel>], iteration_bounds = array<i64: 1>, scalar_prefetch = 0 : i64, scratch_operands = 0 : i64, tpu.core_type = #tpu.core_type<tc>, window_params = [{transform_indices = @transform_0, window_bounds = array<i64: 8, 8, 32>}, {transform_indices = @transform_1, window_bounds = array<i64: 8, 8, 1>}, {pipeline_mode = #tpu.pipeline_mode<synchronous>, transform_indices = @transform_2, window_bounds = array<i64: 32, 256>}, {pipeline_mode = #tpu.pipeline_mode<synchronous>, transform_indices = @transform_3, window_bounds = array<i64: 1, 256>}, {pipeline_mode = #tpu.pipeline_mode<synchronous>, transform_indices = @transform_4, window_bounds = array<i64: 1, 128>}, {pipeline_mode = #tpu.pipeline_mode<synchronous>, transform_indices = @transform_5, window_bounds = array<i64: 1, 1>}, {pipeline_mode = #tpu.pipeline_mode<synchronous>, transform_indices = @transform_6, window_bounds = array<i64: 128, 32>}, {pipeline_mode = #tpu.pipeline_mode<synchronous>, transform_indices = @transform_7, window_bounds = array<i64: 1, 32>}, {transform_indices = @transform_8, window_bounds = array<i64: 8, 32>}]} {
    %c0 = arith.constant 0 : index
    %c0_0 = arith.constant 0 : index
    %c0_1 = arith.constant 0 : index
    %0 = vector.load %arg1[%c0, %c0_0, %c0_1] : memref<8x8x32xf32, #tpu.memory_space<vmem>>, vector<8x8x32xf32>
    %1 = vector.shape_cast %0 : vector<8x8x32xf32> to vector<64x32xf32>
    %c0_2 = arith.constant 0 : index
    %c0_3 = arith.constant 0 : index
    %2 = vector.load %arg3[%c0_2, %c0_3] : memref<32x256xf32, #tpu.memory_space<vmem>>, vector<32x256xf32>
    %cst = arith.constant dense<0.000000e+00> : vector<64x256xf32>
    %3 = tpu.matmul %1, %2, %cst {dimension_numbers = #tpu.dot_dimension_numbers<[1], [0], [0], [1], [0, 0, 1, 1], [], []>} : vector<64x32xf32>, vector<32x256xf32>, vector<64x256xf32> -> vector<64x256xf32>
    %c0_4 = arith.constant 0 : index
    %c0_5 = arith.constant 0 : index
    %4 = vector.load %arg4[%c0_4, %c0_5] : memref<1x256xf32, #tpu.memory_space<vmem>>, vector<1x256xf32>
    %5 = vector.broadcast %4 : vector<1x256xf32> to vector<64x256xf32>
    %6 = arith.addf %3, %5 : vector<64x256xf32>
    %cst_6 = arith.constant 0.000000e+00 : f32
    %7 = vector.broadcast %cst_6 : f32 to vector<64x256xf32>
    %8 = arith.maximumf %6, %7 : vector<64x256xf32>
    %9 = vector.extract_strided_slice %8 {offsets = [0, 0], sizes = [64, 128], strides = [1, 1]} : vector<64x256xf32> to vector<64x128xf32>
    %10 = vector.extract_strided_slice %8 {offsets = [0, 128], sizes = [64, 128], strides = [1, 1]} : vector<64x256xf32> to vector<64x128xf32>
    %c0_7 = arith.constant 0 : index
    %c0_8 = arith.constant 0 : index
    %11 = vector.load %arg5[%c0_7, %c0_8] : memref<1x128xf32, #tpu.memory_space<vmem>>, vector<1x128xf32>
    %12 = vector.broadcast %11 : vector<1x128xf32> to vector<64x128xf32>
    %13 = arith.mulf %9, %12 : vector<64x128xf32>
    %cst_9 = arith.constant dense<0.000000e+00> : vector<64xf32>
    %14 = vector.multi_reduction <add>, %13, %cst_9 [1] : vector<64x128xf32> to vector<64xf32>
    %15 = vector.shape_cast %14 : vector<64xf32> to vector<64x1xf32>
    %c0_10 = arith.constant 0 : index
    %c0_11 = arith.constant 0 : index
    %16 = vector.load %arg6[%c0_10, %c0_11] : memref<1x1xf32, #tpu.memory_space<vmem>>, vector<1x1xf32>
    %17 = vector.broadcast %16 : vector<1x1xf32> to vector<64x1xf32>
    %18 = arith.addf %15, %17 : vector<64x1xf32>
    %19 = arith.negf %18 : vector<64x1xf32>
    %20 = math.exp %19 : vector<64x1xf32>
    %cst_12 = arith.constant 1.000000e+00 : f32
    %21 = vector.broadcast %cst_12 : f32 to vector<64x1xf32>
    %22 = arith.addf %21, %20 : vector<64x1xf32>
    %23 = arith.divf %21, %22 : vector<64x1xf32>
    %c0_13 = arith.constant 0 : index
    %c0_14 = arith.constant 0 : index
    %c0_15 = arith.constant 0 : index
    %24 = vector.load %arg2[%c0_13, %c0_14, %c0_15] : memref<8x8x1xf32, #tpu.memory_space<vmem>>, vector<8x8x1xf32>
    %25 = vector.shape_cast %24 : vector<8x8x1xf32> to vector<64x1xf32>
    %26 = arith.mulf %23, %25 : vector<64x1xf32>
    %c0_16 = arith.constant 0 : index
    %c0_17 = arith.constant 0 : index
    %27 = vector.load %arg7[%c0_16, %c0_17] : memref<128x32xf32, #tpu.memory_space<vmem>>, vector<128x32xf32>
    %cst_18 = arith.constant dense<0.000000e+00> : vector<64x32xf32>
    %28 = tpu.matmul %10, %27, %cst_18 {dimension_numbers = #tpu.dot_dimension_numbers<[1], [0], [0], [1], [0, 0, 1, 1], [], []>} : vector<64x128xf32>, vector<128x32xf32>, vector<64x32xf32> -> vector<64x32xf32>
    %c0_19 = arith.constant 0 : index
    %c0_20 = arith.constant 0 : index
    %29 = vector.load %arg8[%c0_19, %c0_20] : memref<1x32xf32, #tpu.memory_space<vmem>>, vector<1x32xf32>
    %30 = vector.broadcast %29 : vector<1x32xf32> to vector<64x32xf32>
    %31 = arith.addf %28, %30 : vector<64x32xf32>
    %32 = vector.broadcast %26 : vector<64x1xf32> to vector<64x32xf32>
    %33 = arith.mulf %32, %31 : vector<64x32xf32>
    %34 = vector.shape_cast %33 : vector<64x32xf32> to vector<8x8x32xf32>
    %cst_21 = arith.constant dense<0.000000e+00> : vector<8x32xf32>
    %35 = vector.multi_reduction <add>, %34, %cst_21 [0] : vector<8x8x32xf32> to vector<8x32xf32>
    %c0_22 = arith.constant 0 : index
    %c0_23 = arith.constant 0 : index
    %36 = vector.load %arg9[%c0_22, %c0_23] : memref<8x32xf32, #tpu.memory_space<vmem>>, vector<8x32xf32>
    tpu.vector_store %arg9[%c0_22, %c0_23], %35 {strides = array<i32>} : memref<8x32xf32, #tpu.memory_space<vmem>>, vector<8x32xf32>,
    return
  }
  func.func @transform_0(%arg0: i32) -> (i32, i32, i32) {
    %c0_i32 = arith.constant 0 : i32
    %c0_i32_0 = arith.constant 0 : i32
    %c0_i32_1 = arith.constant 0 : i32
    return %c0_i32, %arg0, %c0_i32_0 : i32, i32, i32
  }
  func.func @transform_1(%arg0: i32) -> (i32, i32, i32) {
    %c0_i32 = arith.constant 0 : i32
    %c0_i32_0 = arith.constant 0 : i32
    %c0_i32_1 = arith.constant 0 : i32
    return %c0_i32, %arg0, %c0_i32_0 : i32, i32, i32
  }
  func.func @transform_2(%arg0: i32) -> (i32, i32) {
    %c0_i32 = arith.constant 0 : i32
    %c0_i32_0 = arith.constant 0 : i32
    %c0_i32_1 = arith.constant 0 : i32
    return %c0_i32, %c0_i32_0 : i32, i32
  }
  func.func @transform_3(%arg0: i32) -> (i32, i32) {
    %c0_i32 = arith.constant 0 : i32
    %c0_i32_0 = arith.constant 0 : i32
    %c0_i32_1 = arith.constant 0 : i32
    return %c0_i32, %c0_i32_0 : i32, i32
  }
  func.func @transform_4(%arg0: i32) -> (i32, i32) {
    %c0_i32 = arith.constant 0 : i32
    %c0_i32_0 = arith.constant 0 : i32
    %c0_i32_1 = arith.constant 0 : i32
    return %c0_i32, %c0_i32_0 : i32, i32
  }
  func.func @transform_5(%arg0: i32) -> (i32, i32) {
    %c0_i32 = arith.constant 0 : i32
    %c0_i32_0 = arith.constant 0 : i32
    %c0_i32_1 = arith.constant 0 : i32
    return %c0_i32, %c0_i32_0 : i32, i32
  }
  func.func @transform_6(%arg0: i32) -> (i32, i32) {
    %c0_i32 = arith.constant 0 : i32
    %c0_i32_0 = arith.constant 0 : i32
    %c0_i32_1 = arith.constant 0 : i32
    return %c0_i32, %c0_i32_0 : i32, i32
  }
  func.func @transform_7(%arg0: i32) -> (i32, i32) {
    %c0_i32 = arith.constant 0 : i32
    %c0_i32_0 = arith.constant 0 : i32
    %c0_i32_1 = arith.constant 0 : i32
    return %c0_i32, %c0_i32_0 : i32, i32
  }
  func.func @transform_8(%arg0: i32) -> (i32, i32) {
    %c0_i32 = arith.constant 0 : i32
    %c0_i32_0 = arith.constant 0 : i32
    return %arg0, %c0_i32 : i32, i32
  }
}

</mosaic_0001>

<llo_original>
// kernel: tpu_custom_call.1
$region0: #{tpu_custom_call.1}
  #allocation0 [shape = 'u32[]', space=smem, size = 0x4, offset = 0x4, fixed_abs, tag = 'smem constant byte address 0x4 - core index']
  #allocation1 [shape = 'u32[72,128]{1,0:T(1,128)}', space=vmem, size = 0x9000, scoped, tag = 'internal scratch']
  #allocation2 [shape = 'f32[1,1]{1,0:T(1,128)S(1)}', space=vmem, size = 0x200, scoped, tag = 'scoped memory for tpu_custom_call.1']
  %s0 = inlined_call_operand.vmem [shape: f32[8,8,32], index: 0, kind: input, shape index: {}]
  %s1 = inlined_call_operand.vmem [shape: f32[8,8,1], index: 1, kind: input, shape index: {}]
  %s2 = inlined_call_operand.vmem [shape: f32[32,256], index: 2, kind: input, shape index: {}]
  %s3 = inlined_call_operand.vmem [shape: f32[1,256], index: 3, kind: input, shape index: {}]
  %s4 = inlined_call_operand.vmem [shape: f32[1,128], index: 4, kind: input, shape index: {}]
  %s5 = inlined_call_operand.<no memory space> [shape: f32[1,1], index: 5, kind: input, shape index: {}]
  %s6 = inlined_call_operand.vmem [shape: f32[128,32], index: 6, kind: input, shape index: {}]
  %s7 = inlined_call_operand.vmem [shape: f32[1,32], index: 7, kind: input, shape index: {}]
  %s8 = inlined_call_operand.hbm [shape: f32[8,32], index: 8, kind: output, shape index: {}]
  %s9 = sld [smem:[#allocation0]]
  $region42: #{tpu_custom_call.1} parent=0
    _
  %s11 = ssub.s32 1, %s9
  %s12 = scalar_select 0, %s11, %s9
  %v13 = vstv %s5
  %14 = vst [vmem:[#allocation2] sm:$0x1] %v13
  $region1: #{tpu_custom_call.1} parent=0
    #allocation3 [shape = 'u8[4096]{0}', space=vmem, size = 0x1000, scoped, tag = 'output window, operand 0, single buffered']
    #allocation4 [shape = 's32[1]{0}', space=sflag, size = 0x4, scoped, tag = 'scoped memory for tpu_custom_call.1']
    %15 = vsyncpa [#allocation4], 0
    // Predicated region
    $region2: #{tpu_custom_call.1} parent=1 // pred_check
      _
    $region3: #{tpu_custom_call.1} parent=1 // pred_check_branch
      %17 = sbr.rel (0) target = $region5
    $region4: #{tpu_custom_call.1} parent=1 // pred_region
      _
    $region5: #{tpu_custom_call.1} parent=1 // pred_fallthru
      _
    // Predicated region
    $region6: #{tpu_custom_call.1} parent=1 // pred_check
      _
    $region7: #{tpu_custom_call.1} parent=1 // pred_check_branch
      %19 = sbr.rel (0) target = $region9
    $region8: #{tpu_custom_call.1} parent=1 // pred_region
      _
    $region9: #{tpu_custom_call.1} parent=1 // pred_fallthru
      _
    // Predicated region
    $region10: #{tpu_custom_call.1} parent=1 // pred_check
      _
    $region11: #{tpu_custom_call.1} parent=1 // pred_check_branch
      %21 = sbr.rel (0) target = $region13
    $region12: #{tpu_custom_call.1} parent=1 // pred_region
      _
    $region13: #{tpu_custom_call.1} parent=1 // pred_fallthru
      _
    // Predicated region
    $region14: #{tpu_custom_call.1} parent=1 // pred_check
      _
    $region15: #{tpu_custom_call.1} parent=1 // pred_check_branch
      %23 = sbr.rel (0) target = $region17
    $region16: #{tpu_custom_call.1} parent=1 // pred_region
      _
    $region17: #{tpu_custom_call.1} parent=1 // pred_fallthru
      _
    // Predicated region
    $region18: #{tpu_custom_call.1} parent=1 // pred_check
      _
    $region19: #{tpu_custom_call.1} parent=1 // pred_check_branch
      %25 = sbr.rel (0) target = $region21
    $region20: #{tpu_custom_call.1} parent=1 // pred_region
      _
    $region21: #{tpu_custom_call.1} parent=1 // pred_fallthru
      _
    // Predicated region
    $region22: #{tpu_custom_call.1} parent=1 // pred_check
      _
    $region23: #{tpu_custom_call.1} parent=1 // pred_check_branch
      %27 = sbr.rel (0) target = $region25
    $region24: #{tpu_custom_call.1} parent=1 // pred_region
      _
    $region25: #{tpu_custom_call.1} parent=1 // pred_fallthru
      _
    // Predicated region
    $region26: #{tpu_custom_call.1} parent=1 // pred_check
      _
    $region27: #{tpu_custom_call.1} parent=1 // pred_check_branch
      %29 = sbr.rel (0) target = $region29
    $region28: #{tpu_custom_call.1} parent=1 // pred_region
      _
    $region29: #{tpu_custom_call.1} parent=1 // pred_fallthru
      _
    // Predicated region
    $region30: #{tpu_custom_call.1} parent=1 // pred_check
      _
    $region31: #{tpu_custom_call.1} parent=1 // pred_check_branch
      %31 = sbr.rel (0) target = $region33
    $region32: #{tpu_custom_call.1} parent=1 // pred_region
      _
    $region33: #{tpu_custom_call.1} parent=1 // pred_fallthru
      _
    %v32 = vld [vmem:[%s0] sm:$0xff]
    %v33 = vld [vmem:[%s0 + $0x8] sm:$0xff]
    %v34 = vld [vmem:[%s0 + $0x10] sm:$0xff]
    %v35 = vld [vmem:[%s0 + $0x18] sm:$0xff]
    %v36 = vld [vmem:[%s0 + $0x20] sm:$0xff]
    %v37 = vld [vmem:[%s0 + $0x28] sm:$0xff]
    %v38 = vld [vmem:[%s0 + $0x30] sm:$0xff]
    %v39 = vld [vmem:[%s0 + $0x38] sm:$0xff]
    %v40 = vld [vmem:[%s2] sm:$0xff]
    %v41 = vld [vmem:[%s2 + $0x8] sm:$0xff]
    %v42 = vld [vmem:[%s2 + $0x10] sm:$0xff]
    %v43 = vld [vmem:[%s2 + $0x18] sm:$0xff]
    %v44 = vld [vmem:[%s2 + $0x20] sm:$0xff]
    %v45 = vld [vmem:[%s2 + $0x28] sm:$0xff]
    %v46 = vld [vmem:[%s2 + $0x30] sm:$0xff]
    %v47 = vld [vmem:[%s2 + $0x38] sm:$0xff]
    %v48 = vld [vmem:[%s3] sm:$0x3]
    %v50 = vperm.slane %v48, 0
    %v51 = vperm.slane %v48, 1
    %vm54 = vcmask 261120
    %v56 = vsel %vm54, %v32, 0
    %v59 = vsel %vm54, %v33, 0
    %v62 = vsel %vm54, %v34, 0
    %v65 = vsel %vm54, %v35, 0
    %v68 = vsel %vm54, %v36, 0
    %v71 = vsel %vm54, %v37, 0
    %v74 = vsel %vm54, %v38, 0
    %v77 = vsel %vm54, %v39, 0
    %79 = vmatpush.msra.mxu0 0.0
    %80 = vmatpush.msra.mxu0 0.0
    %81 = vmatpush.msra.mxu0 0.0
    %82 = vmatpush.msra.mxu0 0.0
    %83 = vmatpush.msra.mxu0 0.0
    %84 = vmatpush.msra.mxu0 0.0
    %85 = vmatpush.msra.mxu0 0.0
    %86 = vmatpush.msra.mxu0 0.0
    %87 = vmatpush.msra.mxu0 0.0
    %88 = vmatpush.msra.mxu0 0.0
    %89 = vmatpush.msra.mxu0 0.0
    %90 = vmatpush.msra.mxu0 0.0
    %91 = vmatpush.msra.mxu0 %v46
    %92 = vmatpush.msra.mxu0 %v44
    %93 = vmatpush.msra.mxu0 %v42
    %94 = vmatpush.msra.mxu0 %v40
    %95 = vmatmul.f32.gmra.mxu0 %v56
    %v96 = vpop.f32.mrf.mxu0
    %v97 = vadd.f32 %v50, %v96
    %98 = vmatmul.f32.gmra.mxu0 %v59
    %v99 = vpop.f32.mrf.mxu0
    %v100 = vadd.f32 %v50, %v99
    %101 = vmatmul.f32.gmra.mxu0 %v62
    %v102 = vpop.f32.mrf.mxu0
    %v103 = vadd.f32 %v50, %v102
    %104 = vmatmul.f32.gmra.mxu0 %v65
    %v105 = vpop.f32.mrf.mxu0
    %v106 = vadd.f32 %v50, %v105
    %107 = vmatmul.f32.gmra.mxu0 %v68
    %v108 = vpop.f32.mrf.mxu0
    %v109 = vadd.f32 %v50, %v108
    %110 = vmatmul.f32.gmra.mxu0 %v71
    %v111 = vpop.f32.mrf.mxu0
    %v112 = vadd.f32 %v50, %v111
    %113 = vmatmul.f32.gmra.mxu0 %v74
    %v114 = vpop.f32.mrf.mxu0
    %v115 = vadd.f32 %v50, %v114
    %116 = vmatmul.f32.gmra.mxu0 %v77
    %v117 = vpop.f32.mrf.mxu0
    %v118 = vadd.f32 %v50, %v117
    %119 = vdwg.mxu0
    %120 = vmatpush.msra.mxu0 0.0
    %121 = vmatpush.msra.mxu0 0.0
    %122 = vmatpush.msra.mxu0 0.0
    %123 = vmatpush.msra.mxu0 0.0
    %124 = vmatpush.msra.mxu0 0.0
    %125 = vmatpush.msra.mxu0 0.0
    %126 = vmatpush.msra.mxu0 0.0
    %127 = vmatpush.msra.mxu0 0.0
    %128 = vmatpush.msra.mxu0 0.0
    %129 = vmatpush.msra.mxu0 0.0
    %130 = vmatpush.msra.mxu0 0.0
    %131 = vmatpush.msra.mxu0 0.0
    %132 = vmatpush.msra.mxu0 %v47
    %133 = vmatpush.msra.mxu0 %v45
    %134 = vmatpush.msra.mxu0 %v43
    %135 = vmatpush.msra.mxu0 %v41
    %136 = vmatmul.f32.gmra.mxu0 %v56
    %v137 = vpop.f32.mrf.mxu0
    %v138 = vadd.f32 %v51, %v137
    %139 = vmatmul.f32.gmra.mxu0 %v59
    %v140 = vpop.f32.mrf.mxu0
    %v141 = vadd.f32 %v51, %v140
    %142 = vmatmul.f32.gmra.mxu0 %v62
    %v143 = vpop.f32.mrf.mxu0
    %v144 = vadd.f32 %v51, %v143
    %145 = vmatmul.f32.gmra.mxu0 %v65
    %v146 = vpop.f32.mrf.mxu0
    %v147 = vadd.f32 %v51, %v146
    %148 = vmatmul.f32.gmra.mxu0 %v68
    %v149 = vpop.f32.mrf.mxu0
    %v150 = vadd.f32 %v51, %v149
    %151 = vmatmul.f32.gmra.mxu0 %v71
    %v152 = vpop.f32.mrf.mxu0
    %v153 = vadd.f32 %v51, %v152
    %154 = vmatmul.f32.gmra.mxu0 %v74
    %v155 = vpop.f32.mrf.mxu0
    %v156 = vadd.f32 %v51, %v155
    %157 = vmatmul.f32.gmra.mxu0 %v77
    %v158 = vpop.f32.mrf.mxu0
    %v159 = vadd.f32 %v51, %v158
    %160 = vdwg.mxu0
    %v161 = vmax.f32 %v97, 0.0
    %v162 = vmax.f32 %v138, 0.0
    %v163 = vmax.f32 %v100, 0.0
    %v164 = vmax.f32 %v141, 0.0
    %v165 = vmax.f32 %v103, 0.0
    %v166 = vmax.f32 %v144, 0.0
    %v167 = vmax.f32 %v106, 0.0
    %v168 = vmax.f32 %v147, 0.0
    %v169 = vmax.f32 %v109, 0.0
    %v170 = vmax.f32 %v150, 0.0
    %v171 = vmax.f32 %v112, 0.0
    %v172 = vmax.f32 %v153, 0.0
    %v173 = vmax.f32 %v115, 0.0
    %v174 = vmax.f32 %v156, 0.0
    %v175 = vmax.f32 %v118, 0.0
    %v176 = vmax.f32 %v159, 0.0
    %v177 = vld [vmem:[%s4] sm:$0x1]
    %v179 = vperm.slane %v177, 0
    %v181 = vmul.f32 %v161, %v179
    %v182 = vmul.f32 %v163, %v179
    %v183 = vmul.f32 %v165, %v179
    %v184 = vmul.f32 %v167, %v179
    %v185 = vmul.f32 %v169, %v179
    %v186 = vmul.f32 %v171, %v179
    %v187 = vmul.f32 %v173, %v179
    %v188 = vmul.f32 %v175, %v179
    %189 = vadd.xlane.f32.xlu0 %v181
    %v190 = vpop.xlane.xlu0 %189
    %191 = vadd.xlane.f32.xlu0 %v182
    %v192 = vpop.xlane.xlu0 %191
    %193 = vadd.xlane.f32.xlu0 %v183
    %v194 = vpop.xlane.xlu0 %193
    %195 = vadd.xlane.f32.xlu0 %v184
    %v196 = vpop.xlane.xlu0 %195
    %197 = vadd.xlane.f32.xlu0 %v185
    %v198 = vpop.xlane.xlu0 %197
    %199 = vadd.xlane.f32.xlu0 %v186
    %v200 = vpop.xlane.xlu0 %199
    %201 = vadd.xlane.f32.xlu0 %v187
    %v202 = vpop.xlane.xlu0 %201
    %203 = vadd.xlane.f32.xlu0 %v188
    %v204 = vpop.xlane.xlu0 %203
    %v205 = vld [vmem:[#allocation2] sm:$0x1]
    %v207 = vperm.slane %v205, 0
    %v209 = vadd.f32 %v190, %v207
    %v210 = vadd.f32 %v192, %v207
    %v211 = vadd.f32 %v194, %v207
    %v212 = vadd.f32 %v196, %v207
    %v213 = vadd.f32 %v198, %v207
    %v214 = vadd.f32 %v200, %v207
    %v215 = vadd.f32 %v202, %v207
    %v216 = vadd.f32 %v204, %v207
    %v217 = vxor.u32 %v209, 2147483648
    %v218 = vxor.u32 %v210, 2147483648
    %v219 = vxor.u32 %v211, 2147483648
    %v220 = vxor.u32 %v212, 2147483648
    %v221 = vxor.u32 %v213, 2147483648
    %v222 = vxor.u32 %v214, 2147483648
    %v223 = vxor.u32 %v215, 2147483648
    %v224 = vxor.u32 %v216, 2147483648
    %v225 = vmul.f32 %v217, 1.442695
    %v226 = vpow.pop %v225
    %v227 = vmul.f32 %v218, 1.442695
    %v228 = vpow.pop %v227
    %v229 = vmul.f32 %v219, 1.442695
    %v230 = vpow.pop %v229
    %v231 = vmul.f32 %v220, 1.442695
    %v232 = vpow.pop %v231
    %v233 = vmul.f32 %v221, 1.442695
    %v234 = vpow.pop %v233
    %v235 = vmul.f32 %v222, 1.442695
    %v236 = vpow.pop %v235
    %v237 = vmul.f32 %v223, 1.442695
    %v238 = vpow.pop %v237
    %v239 = vmul.f32 %v224, 1.442695
    %v240 = vpow.pop %v239
    %v241 = vadd.f32 %v226, 1.0
    %v242 = vadd.f32 %v228, 1.0
    %v243 = vadd.f32 %v230, 1.0
    %v244 = vadd.f32 %v232, 1.0
    %v245 = vadd.f32 %v234, 1.0
    %v246 = vadd.f32 %v236, 1.0
    %v247 = vadd.f32 %v238, 1.0
    %v248 = vadd.f32 %v240, 1.0
    %v249 = vrcp.pop %v241
    %v250 = vmul.f32 %v241, %v249
    %v251 = vsub.f32 1.0, %v250
    %v252 = vmul.f32 %v249, %v251
    %v253 = vadd.f32 %v249, %v252
    %vm254 = vweird.f32 %v241
    %vm255 = vweird.f32 %v249
    %vm256 = vmor %vm254, %vm255
    %v257 = vsel %vm256, %v249, %v253
    %v258 = vand.u32 2147483647, %v241
    %vm259 = vcmp.eq.f32.partialorder %v258, 8.507059e+37
    %v260 = vand.u32 %v241, 2147483648
    %v261 = vor.u32 1.1754944e-38, %v260
    %v262 = vsel %vm259, %v261, %v257
    %v263 = vmul.f32 1.0, %v262
    %v264 = vrcp.pop %v242
    %v265 = vmul.f32 %v242, %v264
    %v266 = vsub.f32 1.0, %v265
    %v267 = vmul.f32 %v264, %v266
    %v268 = vadd.f32 %v264, %v267
    %vm269 = vweird.f32 %v242
    %vm270 = vweird.f32 %v264
    %vm271 = vmor %vm269, %vm270
    %v272 = vsel %vm271, %v264, %v268
    %v273 = vand.u32 2147483647, %v242
    %vm274 = vcmp.eq.f32.partialorder %v273, 8.507059e+37
    %v275 = vand.u32 %v242, 2147483648
    %v276 = vor.u32 1.1754944e-38, %v275
    %v277 = vsel %vm274, %v276, %v272
    %v278 = vmul.f32 1.0, %v277
    %v279 = vrcp.pop %v243
    %v280 = vmul.f32 %v243, %v279
    %v281 = vsub.f32 1.0, %v280
    %v282 = vmul.f32 %v279, %v281
    %v283 = vadd.f32 %v279, %v282
    %vm284 = vweird.f32 %v243
    %vm285 = vweird.f32 %v279
    %vm286 = vmor %vm284, %vm285
    %v287 = vsel %vm286, %v279, %v283
    %v288 = vand.u32 2147483647, %v243
    %vm289 = vcmp.eq.f32.partialorder %v288, 8.507059e+37
    %v290 = vand.u32 %v243, 2147483648
    %v291 = vor.u32 1.1754944e-38, %v290
    %v292 = vsel %vm289, %v291, %v287
    %v293 = vmul.f32 1.0, %v292
    %v294 = vrcp.pop %v244
    %v295 = vmul.f32 %v244, %v294
    %v296 = vsub.f32 1.0, %v295
    %v297 = vmul.f32 %v294, %v296
    %v298 = vadd.f32 %v294, %v297
    %vm299 = vweird.f32 %v244
    %vm300 = vweird.f32 %v294
    %vm301 = vmor %vm299, %vm300
    %v302 = vsel %vm301, %v294, %v298
    %v303 = vand.u32 2147483647, %v244
    %vm304 = vcmp.eq.f32.partialorder %v303, 8.507059e+37
    %v305 = vand.u32 %v244, 2147483648
    %v306 = vor.u32 1.1754944e-38, %v305
    %v307 = vsel %vm304, %v306, %v302
    %v308 = vmul.f32 1.0, %v307
    %v309 = vrcp.pop %v245
    %v310 = vmul.f32 %v245, %v309
    %v311 = vsub.f32 1.0, %v310
    %v312 = vmul.f32 %v309, %v311
    %v313 = vadd.f32 %v309, %v312
    %vm314 = vweird.f32 %v245
    %vm315 = vweird.f32 %v309
    %vm316 = vmor %vm314, %vm315
    %v317 = vsel %vm316, %v309, %v313
    %v318 = vand.u32 2147483647, %v245
    %vm319 = vcmp.eq.f32.partialorder %v318, 8.507059e+37
    %v320 = vand.u32 %v245, 2147483648
    %v321 = vor.u32 1.1754944e-38, %v320
    %v322 = vsel %vm319, %v321, %v317
    %v323 = vmul.f32 1.0, %v322
    %v324 = vrcp.pop %v246
    %v325 = vmul.f32 %v246, %v324
    %v326 = vsub.f32 1.0, %v325
    %v327 = vmul.f32 %v324, %v326
    %v328 = vadd.f32 %v324, %v327
    %vm329 = vweird.f32 %v246
    %vm330 = vweird.f32 %v324
    %vm331 = vmor %vm329, %vm330
    %v332 = vsel %vm331, %v324, %v328
    %v333 = vand.u32 2147483647, %v246
    %vm334 = vcmp.eq.f32.partialorder %v333, 8.507059e+37
    %v335 = vand.u32 %v246, 2147483648
    %v336 = vor.u32 1.1754944e-38, %v335
    %v337 = vsel %vm334, %v336, %v332
    %v338 = vmul.f32 1.0, %v337
    %v339 = vrcp.pop %v247
    %v340 = vmul.f32 %v247, %v339
    %v341 = vsub.f32 1.0, %v340
    %v342 = vmul.f32 %v339, %v341
    %v343 = vadd.f32 %v339, %v342
    %vm344 = vweird.f32 %v247
    %vm345 = vweird.f32 %v339
    %vm346 = vmor %vm344, %vm345
    %v347 = vsel %vm346, %v339, %v343
    %v348 = vand.u32 2147483647, %v247
    %vm349 = vcmp.eq.f32.partialorder %v348, 8.507059e+37
    %v350 = vand.u32 %v247, 2147483648
    %v351 = vor.u32 1.1754944e-38, %v350
    %v352 = vsel %vm349, %v351, %v347
    %v353 = vmul.f32 1.0, %v352
    %v354 = vrcp.pop %v248
    %v355 = vmul.f32 %v248, %v354
    %v356 = vsub.f32 1.0, %v355
    %v357 = vmul.f32 %v354, %v356
    %v358 = vadd.f32 %v354, %v357
    %vm359 = vweird.f32 %v248
    %vm360 = vweird.f32 %v354
    %vm361 = vmor %vm359, %vm360
    %v362 = vsel %vm361, %v354, %v358
    %v363 = vand.u32 2147483647, %v248
    %vm364 = vcmp.eq.f32.partialorder %v363, 8.507059e+37
    %v365 = vand.u32 %v248, 2147483648
    %v366 = vor.u32 1.1754944e-38, %v365
    %v367 = vsel %vm364, %v366, %v362
    %v368 = vmul.f32 1.0, %v367
    %v369 = vld [vmem:[%s1] sm:$0xff]
    %v370 = vld [vmem:[%s1 + $0x8] sm:$0xff]
    %v371 = vld [vmem:[%s1 + $0x10] sm:$0xff]
    %v372 = vld [vmem:[%s1 + $0x18] sm:$0xff]
    %v373 = vld [vmem:[%s1 + $0x20] sm:$0xff]
    %v374 = vld [vmem:[%s1 + $0x28] sm:$0xff]
    %v375 = vld [vmem:[%s1 + $0x30] sm:$0xff]
    %v376 = vld [vmem:[%s1 + $0x38] sm:$0xff]
    %v377 = vmul.f32 %v263, %v369
    %v378 = vmul.f32 %v278, %v370
    %v379 = vmul.f32 %v293, %v371
    %v380 = vmul.f32 %v308, %v372
    %v381 = vmul.f32 %v323, %v373
    %v382 = vmul.f32 %v338, %v374
    %v383 = vmul.f32 %v353, %v375
    %v384 = vmul.f32 %v368, %v376
    %v385 = vld [vmem:[%s6] sm:$0xff]
    %v386 = vld [vmem:[%s6 + $0x8] sm:$0xff]
    %v387 = vld [vmem:[%s6 + $0x10] sm:$0xff]
    %v388 = vld [vmem:[%s6 + $0x18] sm:$0xff]
    %v389 = vld [vmem:[%s6 + $0x20] sm:$0xff]
    %v390 = vld [vmem:[%s6 + $0x28] sm:$0xff]
    %v391 = vld [vmem:[%s6 + $0x30] sm:$0xff]
    %v392 = vld [vmem:[%s6 + $0x38] sm:$0xff]
    %v393 = vld [vmem:[%s6 + $0x40] sm:$0xff]
    %v394 = vld [vmem:[%s6 + $0x48] sm:$0xff]
    %v395 = vld [vmem:[%s6 + $0x50] sm:$0xff]
    %v396 = vld [vmem:[%s6 + $0x58] sm:$0xff]
    %v397 = vld [vmem:[%s6 + $0x60] sm:$0xff]
    %v398 = vld [vmem:[%s6 + $0x68] sm:$0xff]
    %v399 = vld [vmem:[%s6 + $0x70] sm:$0xff]
    %v400 = vld [vmem:[%s6 + $0x78] sm:$0xff]
    %v401 = vld [vmem:[%s7] sm:$0x1]
    %v403 = vperm.slane %v401, 0
    %405 = vmatpush.msra.mxu0 %v400
    %406 = vmatpush.msra.mxu0 %v399
    %407 = vmatpush.msra.mxu0 %v398
    %408 = vmatpush.msra.mxu0 %v397
    %409 = vmatpush.msra.mxu0 %v396
    %410 = vmatpush.msra.mxu0 %v395
    %411 = vmatpush.msra.mxu0 %v394
    %412 = vmatpush.msra.mxu0 %v393
    %413 = vmatpush.msra.mxu0 %v392
    %414 = vmatpush.msra.mxu0 %v391
    %415 = vmatpush.msra.mxu0 %v390
    %416 = vmatpush.msra.mxu0 %v389
    %417 = vmatpush.msra.mxu0 %v388
    %418 = vmatpush.msra.mxu0 %v387
    %419 = vmatpush.msra.mxu0 %v386
    %420 = vmatpush.msra.mxu0 %v385
    %421 = vmatmul.f32.gmra.mxu0 %v162
    %v422 = vpop.f32.mrf.mxu0
    %v423 = vadd.f32 %v403, %v422
    %424 = vmatmul.f32.gmra.mxu0 %v164
    %v425 = vpop.f32.mrf.mxu0
    %v426 = vadd.f32 %v403, %v425
    %427 = vmatmul.f32.gmra.mxu0 %v166
    %v428 = vpop.f32.mrf.mxu0
    %v429 = vadd.f32 %v403, %v428
    %430 = vmatmul.f32.gmra.mxu0 %v168
    %v431 = vpop.f32.mrf.mxu0
    %v432 = vadd.f32 %v403, %v431
    %433 = vmatmul.f32.gmra.mxu0 %v170
    %v434 = vpop.f32.mrf.mxu0
    %v435 = vadd.f32 %v403, %v434
    %436 = vmatmul.f32.gmra.mxu0 %v172
    %v437 = vpop.f32.mrf.mxu0
    %v438 = vadd.f32 %v403, %v437
    %439 = vmatmul.f32.gmra.mxu0 %v174
    %v440 = vpop.f32.mrf.mxu0
    %v441 = vadd.f32 %v403, %v440
    %442 = vmatmul.f32.gmra.mxu0 %v176
    %v443 = vpop.f32.mrf.mxu0
    %v444 = vadd.f32 %v403, %v443
    %445 = vdwg.mxu0
    %447 = vset.pattern.permute.xlu0 0
    %448 = vperm.xlu0 %447, %v377
    %v449 = vpop.permute.xlu0 %448
    %452 = vset.pattern.permute.xlu0 0
    %453 = vperm.xlu0 %452, %v378
    %v454 = vpop.permute.xlu0 %453
    %457 = vset.pattern.permute.xlu0 0
    %458 = vperm.xlu0 %457, %v379
    %v459 = vpop.permute.xlu0 %458
    %462 = vset.pattern.permute.xlu0 0
    %463 = vperm.xlu0 %462, %v380
    %v464 = vpop.permute.xlu0 %463
    %467 = vset.pattern.permute.xlu0 0
    %468 = vperm.xlu0 %467, %v381
    %v469 = vpop.permute.xlu0 %468
    %472 = vset.pattern.permute.xlu0 0
    %473 = vperm.xlu0 %472, %v382
    %v474 = vpop.permute.xlu0 %473
    %477 = vset.pattern.permute.xlu0 0
    %478 = vperm.xlu0 %477, %v383
    %v479 = vpop.permute.xlu0 %478
    %482 = vset.pattern.permute.xlu0 0
    %483 = vperm.xlu0 %482, %v384
    %v484 = vpop.permute.xlu0 %483
    %v486 = vmul.f32 %v449, %v423
    %v487 = vmul.f32 %v454, %v426
    %v488 = vmul.f32 %v459, %v429
    %v489 = vmul.f32 %v464, %v432
    %v490 = vmul.f32 %v469, %v435
    %v491 = vmul.f32 %v474, %v438
    %v492 = vmul.f32 %v479, %v441
    %v493 = vmul.f32 %v484, %v444
    %v494 = vsel %vm54, %v486, 0.0
    %v495 = vsel %vm54, %v487, 0.0
    %v496 = vadd.f32 %v494, %v495
    %v497 = vsel %vm54, %v488, 0.0
    %v498 = vadd.f32 %v496, %v497
    %v499 = vsel %vm54, %v489, 0.0
    %v500 = vadd.f32 %v498, %v499
    %v501 = vsel %vm54, %v490, 0.0
    %v502 = vadd.f32 %v500, %v501
    %v503 = vsel %vm54, %v491, 0.0
    %v504 = vadd.f32 %v502, %v503
    %v505 = vsel %vm54, %v492, 0.0
    %v506 = vadd.f32 %v504, %v505
    %v507 = vsel %vm54, %v493, 0.0
    %v508 = vadd.f32 %v506, %v507
    %509 = vst.msk [vmem:[#allocation3] sm:$0xff] %vm54, %v508
    // Predicated region
    $region34: #{tpu_custom_call.1} parent=1 // pred_check
      _
    $region35: #{tpu_custom_call.1} parent=1 // pred_check_branch
      %511 = sbr.rel (0) target = $region37
    $region36: #{tpu_custom_call.1} parent=1 // pred_region
      %513 = vsyncadd [#allocation4], 0
      %s515 = sshll.u32 [#allocation3], 4
      %s516 = int_to_ptr.vmem [resolvable:$true] %s515
      %s517 = sshll.u32 %s8, 4
      %s518 = int_to_ptr.hbm [resolvable:$true] %s517
      %520 = dma.vmem_to_hbm [thread:$0]  %s516, 128, %s518, [#allocation4]
    $region37: #{tpu_custom_call.1} parent=1 // pred_fallthru
      _
    // Predicated region
    $region38: #{tpu_custom_call.1} parent=1 // pred_check
      _
    $region39: #{tpu_custom_call.1} parent=1 // pred_check_branch
      %522 = sbr.rel (0) target = $region41
    $region40: #{tpu_custom_call.1} parent=1 // pred_region
      %524 = dma.done [#allocation4], 128
    $region41: #{tpu_custom_call.1} parent=1 // pred_fallthru
      _
    %525 = vsyncpa [#allocation4], 1

</llo_original>
